<compile_context>
chip_gen: v5e
topology: v5e:2x2
jax: 0.10.0
libtpu: 0.0.40
codegen_flags: <defaults>
</compile_context>

<pallas_src>
import jax
import jax.numpy as jnp
from jax.experimental import pallas as pl
from jax.experimental.pallas import tpu as pltpu


def _num_tensorcores():
    """Best-effort TensorCore-per-chip count (2 on v7x, 1 on v5e/v6e)."""
    n = 1
    try:
        info = pltpu.get_tpu_info()
        for attr in ("num_cores", "core_count", "num_tensorcores",
                     "tensorcores_per_chip", "num_tensor_cores"):
            v = getattr(info, attr, None)
            if isinstance(v, int) and v > 0:
                n = max(n, v)
    except Exception:
        pass
    if n == 1:
        try:
            kind = jax.devices()[0].device_kind.lower()
            if "v7" in kind or "7x" in kind:
                n = 2
        except Exception:
            pass
    return min(n, 2)


def _choose_tiling(S, N, itemsize, num_cores,
                   target_bytes=4 * 1024 * 1024):
    """Jointly pick (num_n_tiles, n_tile, seq_tile, num_s_tiles).

    * n_tile is N unless N is a multiple of 128, in which case it may be
      split (a) across TensorCores and (b) further, so that an 8-row tile
      fits the per-buffer VMEM budget.
    * seq_tile is the largest multiple of 8 whose tile fits the budget
      (capped at S).  S need not be divisible by seq_tile -- the partial
      last tile is masked inside the kernel.
    """
    num_n = 1
    if N % 128 == 0:
        groups = N // 128
        if num_cores > 1 and groups % num_cores == 0:
            num_n = num_cores
        # Shrink n_tile (more 128-lane tiles) until an 8-row tile fits budget.
        while (N // num_n) * 8 * itemsize > target_bytes and \
                groups % (num_n * 2) == 0:
            num_n *= 2
    n_tile = N // num_n

    rows_budget = (target_bytes // max(1, n_tile * itemsize)) // 8 * 8
    rows_budget = max(8, rows_budget)
    seq_tile = S if rows_budget >= S else rows_budget
    num_s = pl.cdiv(S, seq_tile)
    return num_n, n_tile, seq_tile, num_s


def _make_awe_sum_kernel(S, seq_tile, mask_needed):
    """Kernel: accumulate the sequence-axis sum into the resident output.

    x_ref: (seq_tile, n_tile) tile of the flattened (S, B*D) input
    o_ref: (1, n_tile) float32 output block (resident across the seq axis)
    """

    def kernel(x_ref, o_ref):
        s = pl.program_id(1)  # reduction axis (last grid axis)

        @pl.when(s == 0)
        def _():
            o_ref[...] = jnp.zeros_like(o_ref)

        x = x_ref[...]
        if mask_needed:
            # Last seq tile is partial: zero out rows past the real extent.
            valid = S - s * seq_tile  # >= seq_tile for all full tiles
            row = jax.lax.broadcasted_iota(jnp.int32, x.shape, 0)
            x = jnp.where(row < valid, x, jnp.zeros_like(x))

        # f32 accumulator dtype inside the reduce (no full-tile f32 copy).
        o_ref[...] += jnp.sum(x, axis=0, dtype=jnp.float32, keepdims=True)

    return kernel


def awe_sentence_encoder(x, lens):
    """Average-word-embedding sentence encoder.

    x:    (S, B, D) array of word embeddings (zero-padded past lens)
    lens: (B,) array of sentence lengths
    returns (B, D) averaged embeddings, dtype == x.dtype
    """
    S, B, D = x.shape
    N = B * D

    # Free, lane-dense view: merge the trailing contiguous (B, D) dims.
    x2 = x.reshape(S, N)

    itemsize = jnp.dtype(x.dtype).itemsize
    num_cores = _num_tensorcores()
    num_n, n_tile, seq_tile, num_s = _choose_tiling(S, N, itemsize, num_cores)
    mask_needed = (S % seq_tile) != 0

    kernel = _make_awe_sum_kernel(S, seq_tile, mask_needed)

    summed = pl.pallas_call(
        kernel,
        out_shape=jax.ShapeDtypeStruct((1, N), jnp.float32),
        grid_spec=pltpu.PrefetchScalarGridSpec(
            num_scalar_prefetch=0,
            grid=(num_n, num_s),
            in_specs=[
                pl.BlockSpec((seq_tile, n_tile), lambda n, s: (s, n)),
            ],
            out_specs=pl.BlockSpec((1, n_tile), lambda n, s: (0, n)),
        ),
        compiler_params=pltpu.CompilerParams(
            dimension_semantics=("parallel", "arbitrary"),
            vmem_limit_bytes=32 * 1024 * 1024,
        ),
    )(x2)

    # Tiny XLA epilogue: reshape to (B, D) and divide by lens (per batch row).
    avg = summed.reshape(B, D) / lens.astype(jnp.float32)[:, None]
    return avg.astype(x.dtype)


def _reference(x, lens):
    summed = jnp.sum(x.astype(jnp.float32), axis=0)       # (B, D)
    avg = (summed.T / lens.astype(jnp.float32)).T          # mirrors transpose/div/transpose
    return avg.astype(x.dtype)


if __name__ == "__main__":
    # Small shapes consistent with the module: seq=8, batch=2, word_emb_dim=32
    S, B, D = 8, 2, 32
    key = jax.random.PRNGKey(0)
    kx, kl = jax.random.split(key)
    x = jax.random.normal(kx, (S, B, D), dtype=jnp.float32)
    lens = jax.random.randint(kl, (B,), 1, S + 1).astype(jnp.float32)

    out = awe_sentence_encoder(x, lens)
    out = jax.block_until_ready(out)

    ref = _reference(x, lens)
    assert out.shape == (B, D)
    assert jnp.allclose(out, ref, atol=1e-5, rtol=1e-5), "mismatch vs reference"

    print("KERNEL_OK")
</pallas_src>

<mosaic_0001>
module attributes {stable_mosaic.version = 11 : i64} {
  func.func @kernel(%arg0: i32, %arg1: i32, %arg2: memref<8x64xf32, #tpu.memory_space<vmem>>, %arg3: memref<1x64xf32, #tpu.memory_space<vmem>>) attributes {dimension_semantics = [#tpu.dimension_semantics<parallel>, #tpu.dimension_semantics<arbitrary>], iteration_bounds = array<i64: 1, 1>, scalar_prefetch = 0 : i64, scratch_operands = 0 : i64, tpu.core_type = #tpu.core_type<tc>, window_params = [{transform_indices = @transform_0, window_bounds = array<i64: 8, 64>}, {transform_indices = @transform_1, window_bounds = array<i64: 1, 64>}]} {
    %c0_i32 = arith.constant 0 : i32
    %0 = arith.cmpi eq, %arg1, %c0_i32 : i32
    %1 = arith.extui %0 : i1 to i32
    %c0_i32_0 = arith.constant 0 : i32
    %2 = arith.cmpi ne, %1, %c0_i32_0 : i32
    scf.if %2 {
      %cst_6 = arith.constant 0.000000e+00 : f32
      %9 = vector.broadcast %cst_6 : f32 to vector<1x64xf32>
      %c0_7 = arith.constant 0 : index
      %c0_8 = arith.constant 0 : index
      %10 = vector.load %arg3[%c0_7, %c0_8] : memref<1x64xf32, #tpu.memory_space<vmem>>, vector<1x64xf32>
      tpu.vector_store %arg3[%c0_7, %c0_8], %9 {strides = array<i32>} : memref<1x64xf32, #tpu.memory_space<vmem>>, vector<1x64xf32>,
    } else {
    }
    %c0 = arith.constant 0 : index
    %c0_1 = arith.constant 0 : index
    %3 = vector.load %arg2[%c0, %c0_1] : memref<8x64xf32, #tpu.memory_space<vmem>>, vector<8x64xf32>
    %c0_2 = arith.constant 0 : index
    %c0_3 = arith.constant 0 : index
    %4 = vector.load %arg3[%c0_2, %c0_3] : memref<1x64xf32, #tpu.memory_space<vmem>>, vector<1x64xf32>
    %cst = arith.constant dense<0.000000e+00> : vector<64xf32>
    %5 = vector.multi_reduction <add>, %3, %cst [0] : vector<8x64xf32> to vector<64xf32>
    %6 = vector.shape_cast %5 : vector<64xf32> to vector<1x64xf32>
    %7 = arith.addf %4, %6 : vector<1x64xf32>
    %c0_4 = arith.constant 0 : index
    %c0_5 = arith.constant 0 : index
    %8 = vector.load %arg3[%c0_4, %c0_5] : memref<1x64xf32, #tpu.memory_space<vmem>>, vector<1x64xf32>
    tpu.vector_store %arg3[%c0_4, %c0_5], %7 {strides = array<i32>} : memref<1x64xf32, #tpu.memory_space<vmem>>, vector<1x64xf32>,
    return
  }
  func.func @transform_0(%arg0: i32, %arg1: i32) -> (i32, i32) {
    %c0_i32 = arith.constant 0 : i32
    return %arg1, %arg0 : i32, i32
  }
  func.func @transform_1(%arg0: i32, %arg1: i32) -> (i32, i32) {
    %c0_i32 = arith.constant 0 : i32
    %c0_i32_0 = arith.constant 0 : i32
    return %c0_i32, %arg0 : i32, i32
  }
}

</mosaic_0001>

<llo_original>
// kernel: tpu_custom_call.1
$region0: #{tpu_custom_call.1}
  #allocation0 [shape = 'u32[]', space=smem, size = 0x4, offset = 0x4, fixed_abs, tag = 'smem constant byte address 0x4 - core index']
  #allocation1 [shape = 'u32[72,128]{1,0:T(1,128)}', space=vmem, size = 0x9000, scoped, tag = 'internal scratch']
  %s0 = inlined_call_operand.hbm [shape: f32[8,64], index: 0, kind: input, shape index: {}]
  %s1 = inlined_call_operand.hbm [shape: f32[1,64], index: 1, kind: output, shape index: {}]
  %s2 = sld [smem:[#allocation0]]
  $region22: #{tpu_custom_call.1} parent=0
    _
  %s4 = ssub.s32 1, %s2
  %s5 = scalar_select 0, %s4, %s2
  $region1: #{tpu_custom_call.1} parent=0
    #allocation2 [shape = 'u8[4096]{0}', space=vmem, size = 0x1000, scoped, tag = 'input window, operand 0, single buffered']
    #allocation3 [shape = 's32[1]{0}', space=sflag, size = 0x4, scoped, tag = 'scoped memory for tpu_custom_call.1']
    #allocation4 [shape = 's32[1]{0}', space=sflag, size = 0x4, scoped, tag = 'scoped memory for tpu_custom_call.1']
    #allocation5 [shape = 'u8[512]{0}', space=vmem, size = 0x400, scoped, tag = 'output window, operand 0, single buffered']
    %6 = vsyncpa [#allocation3], 0
    %7 = vsyncpa [#allocation4], 0
    // Predicated region
    $region2: #{tpu_custom_call.1} parent=1 // pred_check
      _
    $region3: #{tpu_custom_call.1} parent=1 // pred_check_branch
      %9 = sbr.rel (0) target = $region5
    $region4: #{tpu_custom_call.1} parent=1 // pred_region
      %11 = vsyncadd [#allocation3], 0
      %s13 = sshll.u32 %s0, 4
      %s14 = int_to_ptr.hbm [resolvable:$true] %s13
      %s15 = sshll.u32 [#allocation2], 4
      %s16 = int_to_ptr.vmem [resolvable:$true] %s15
      %18 = dma.hbm_to_vmem [thread:$0]  %s14, 128, %s16, [#allocation3]
    $region5: #{tpu_custom_call.1} parent=1 // pred_fallthru
      _
    // Predicated region
    $region6: #{tpu_custom_call.1} parent=1 // pred_check
      _
    $region7: #{tpu_custom_call.1} parent=1 // pred_check_branch
      %20 = sbr.rel (0) target = $region9
    $region8: #{tpu_custom_call.1} parent=1 // pred_region
      %22 = dma.done [#allocation3], 128
    $region9: #{tpu_custom_call.1} parent=1 // pred_fallthru
      _
    %p23 = scmp.eq.s32.totalorder 0, 0
    // Predicated region
    $region10: #{tpu_custom_call.1} parent=1 // pred_check
      %p24 = pneg %p23
    $region11: #{tpu_custom_call.1} parent=1 // pred_check_branch
      %26 = sbr.rel (%p24) target = $region13
    $region12: #{tpu_custom_call.1} parent=1 // pred_region
      %vm27 = vcmask 516096
      %28 = vst.msk [vmem:[#allocation5] sm:$0x1] %vm27, 0.0
    $region13: #{tpu_custom_call.1} parent=1 // pred_fallthru
      _
    %v29 = vld [vmem:[#allocation2] sm:$0xff]
    %v30 = vld [vmem:[#allocation5] sm:$0x1]
    %vm31 = vcmask 523264
    %v32 = vsel %vm31, %v29, 0.0
    %v33 = vrot.slane %v32, 4
    %v34 = vadd.f32 %v32, %v33
    %v35 = vrot.slane %v34, 2
    %v36 = vadd.f32 %v34, %v35
    %v37 = vrot.slane %v36, 1
    %v38 = vadd.f32 %v36, %v37
    %v39 = vadd.f32 %v30, %v38
    %vm40 = vcmask 516096
    %41 = vst.msk [vmem:[#allocation5] sm:$0x1] %vm40, %v39
    // Predicated region
    $region14: #{tpu_custom_call.1} parent=1 // pred_check
      _
    $region15: #{tpu_custom_call.1} parent=1 // pred_check_branch
      %43 = sbr.rel (0) target = $region17
    $region16: #{tpu_custom_call.1} parent=1 // pred_region
      %45 = vsyncadd [#allocation4], 0
      %s47 = sshll.u32 [#allocation5], 4
      %s48 = int_to_ptr.vmem [resolvable:$true] %s47
      %s49 = sshll.u32 %s1, 4
      %s50 = int_to_ptr.hbm [resolvable:$true] %s49
      %52 = dma.vmem_to_hbm [thread:$0]  %s48, 16, %s50, [#allocation4]
    $region17: #{tpu_custom_call.1} parent=1 // pred_fallthru
      _
    // Predicated region
    $region18: #{tpu_custom_call.1} parent=1 // pred_check
      _
    $region19: #{tpu_custom_call.1} parent=1 // pred_check_branch
      %54 = sbr.rel (0) target = $region21
    $region20: #{tpu_custom_call.1} parent=1 // pred_region
      %56 = dma.done [#allocation4], 16
    $region21: #{tpu_custom_call.1} parent=1 // pred_fallthru
      _
    %57 = vsyncpa [#allocation3], 1
    %58 = vsyncpa [#allocation4], 1

</llo_original>
